<compile_context>
chip_gen: v5e
topology: v5e:2x2
jax: 0.10.0
libtpu: 0.0.40
codegen_flags: <defaults>
</compile_context>

<pallas_src>
import numpy as np
import jax
import jax.numpy as jnp
from jax.experimental import pallas as pl
from jax.experimental.pallas import tpu as pltpu

N_QUBITS = 4
N_LAYERS = 2
N_CLASSES = 10
DIM = 2 ** N_QUBITS          # 16
B_ALIGN = 128                # batch (lane) alignment
TB_CAP = 8192                # max batch tile (lanes); 2 * 16 * 8192 * 4B << VMEM everywhere


# ----------------------------------------------------------------------------------
# Glue: build the (input-independent) StronglyEntanglingLayers unitary in numpy.
# Wire 0 is the most-significant bit (PennyLane convention).
# ----------------------------------------------------------------------------------
def _rz(a):
    return np.array([[np.exp(-0.5j * a), 0.0], [0.0, np.exp(0.5j * a)]], dtype=np.complex128)


def _ry(t):
    c, s = np.cos(t / 2.0), np.sin(t / 2.0)
    return np.array([[c, -s], [s, c]], dtype=np.complex128)


def _rot(phi, theta, omega):
    # PennyLane Rot(phi, theta, omega) = RZ(omega) RY(theta) RZ(phi)
    return _rz(omega) @ _ry(theta) @ _rz(phi)


def _single_qubit_full(gate, wire, n):
    full = np.eye(2 ** wire, dtype=np.complex128)
    full = np.kron(full, gate)
    full = np.kron(full, np.eye(2 ** (n - 1 - wire), dtype=np.complex128))
    return full


def _cnot_full(control, target, n):
    dim = 2 ** n
    m = np.zeros((dim, dim), dtype=np.complex128)
    for s in range(dim):
        if (s >> (n - 1 - control)) & 1:
            s2 = s ^ (1 << (n - 1 - target))
        else:
            s2 = s
        m[s2, s] = 1.0
    return m


def build_entangling_unitary(weights_np):
    """weights_np: (n_layers, n_qubits, 3).  Returns 16x16 complex unitary."""
    n = N_QUBITS
    u_total = np.eye(2 ** n, dtype=np.complex128)
    for l in range(N_LAYERS):
        u_layer = np.eye(2 ** n, dtype=np.complex128)
        # single-qubit Rot gates
        for w in range(n):
            g = _rot(weights_np[l, w, 0], weights_np[l, w, 1], weights_np[l, w, 2])
            u_layer = _single_qubit_full(g, w, n) @ u_layer
        # CNOT ring with layer-dependent range (PennyLane default ranges)
        r = (l % (n - 1)) + 1
        for w in range(n):
            u_layer = _cnot_full(w, (w + r) % n, n) @ u_layer
        u_total = u_layer @ u_total
    return u_total


# ----------------------------------------------------------------------------------
# Pallas kernel (batch on lanes):
#   angles (4, TB) -> product state psi0 (16, TB) -> [Re(U); Im(U)] @ psi0 (32, TB)
#   -> |psi|^2 (16, TB) -> fused (Z-expval + linear head + bias) (16, TB) output slab.
# ----------------------------------------------------------------------------------
def vqc_kernel(ang_ref, ucat_ref, wfold_ref, out_ref):
    ang = ang_ref[...]                          # (n_qubits, TB) f32 RY angles
    ch = jnp.cos(ang * 0.5)                     # (n_qubits, TB)
    sh = jnp.sin(ang * 0.5)                     # (n_qubits, TB)
    tb = ang.shape[1]

    # Product state after the RY embedding:
    #   psi0[s, b] = prod_i ( bit_i(s) ? sin(theta_i/2) : cos(theta_i/2) )
    # State index varies along sublanes; the per-qubit (1, TB) rows broadcast across
    # sublanes (cheap stride-0 broadcast).  Wire 0 = MSB.
    state = jax.lax.broadcasted_iota(jnp.int32, (DIM, tb), 0)       # (16, TB)
    psi0 = jnp.ones((DIM, tb), dtype=jnp.float32)
    for i in range(N_QUBITS):
        bit = (state & (1 << (N_QUBITS - 1 - i))) != 0              # (16, TB) bool
        psi0 = psi0 * jnp.where(bit, sh[i:i + 1, :], ch[i:i + 1, :])

    # Single fused matmul against [Re(U); Im(U)]  -> (32, TB)
    psi_both = jnp.dot(ucat_ref[...], psi0, preferred_element_type=jnp.float32)
    probs = psi_both[:DIM, :] ** 2 + psi_both[DIM:, :] ** 2         # (16, TB)

    # Fused Z-expectation + linear head (bias folded in; rows >= n_classes are zero).
    logits_t = jnp.dot(wfold_ref[...], probs, preferred_element_type=jnp.float32)
    out_ref[...] = logits_t.astype(out_ref.dtype)                   # (16, TB)


def vqc_forward(x, u_cat2, w_fold2):
    """x: (B, C, H, W) float32 NCHW. Returns (B, N_CLASSES) logits."""
    b = x.shape[0]
    flat = x.reshape(b, -1).astype(jnp.float32)
    angles_t = flat[:, :N_QUBITS].T             # glue: flatten + slice + transpose -> (4, B)

    # Batch tiling on the lane axis: tiles are multiples of 128.  Padded columns compute
    # the |0..0> state and are sliced away below.  For larger batches use >= 2 tiles so
    # the "parallel" grid axis can shard across v7x's two TensorCores.
    b_min = pl.cdiv(b, B_ALIGN) * B_ALIGN
    if b_min <= B_ALIGN:
        # Tiny batch: one minimal tile.  (A pure-XLA path would also be fine here.)
        tb = B_ALIGN
    else:
        half = pl.cdiv(b_min, 2)
        tb = min(TB_CAP, pl.cdiv(half, B_ALIGN) * B_ALIGN)
    n_tiles = pl.cdiv(b_min, tb)
    b_pad = n_tiles * tb
    if b_pad != b:
        angles_t = jnp.pad(angles_t, ((0, 0), (0, b_pad - b)))

    out = pl.pallas_call(
        vqc_kernel,
        out_shape=jax.ShapeDtypeStruct((DIM, b_pad), jnp.float32),
        grid=(n_tiles,),
        in_specs=[
            pl.BlockSpec((N_QUBITS, tb), lambda i: (0, i)),     # angles tile (4, TB)
            pl.BlockSpec((2 * DIM, DIM), lambda i: (0, 0)),     # [Re(U); Im(U)], resident
            pl.BlockSpec((DIM, DIM), lambda i: (0, 0)),         # fused head (bias folded), resident
        ],
        out_specs=pl.BlockSpec((DIM, tb), lambda i: (0, i)),    # (16, TB) lane-dense slab
        compiler_params=pltpu.CompilerParams(
            dimension_semantics=("parallel",)),                 # megacore on v7x
    )(angles_t, u_cat2, w_fold2)

    # Small glue slice/transpose: the slab is only (16, b_pad) f32 now.
    return out[:N_CLASSES, :b].T


# ----------------------------------------------------------------------------------
# Pure-JAX reference (same math, unfused, row-major) for a correctness check.
# ----------------------------------------------------------------------------------
def vqc_reference(x, u_real_T, u_imag_T, bits_t, zsign, fc_w_t, fc_b):
    b = x.shape[0]
    angles = x.reshape(b, -1)[:, :N_QUBITS].astype(jnp.float32)
    ch, sh = jnp.cos(angles * 0.5), jnp.sin(angles * 0.5)
    psi0 = jnp.ones((b, DIM), jnp.float32)
    for i in range(N_QUBITS):
        bi = bits_t[i][None, :]
        psi0 = psi0 * (bi * sh[:, i:i + 1] + (1.0 - bi) * ch[:, i:i + 1])
    hp = jax.lax.Precision.HIGHEST
    psi_r = jnp.dot(psi0, u_real_T, precision=hp)
    psi_i = jnp.dot(psi0, u_imag_T, precision=hp)
    probs = psi_r ** 2 + psi_i ** 2
    q = jnp.dot(probs, zsign, precision=hp)
    return jnp.dot(q, fc_w_t, precision=hp) + fc_b


if __name__ == "__main__":
    key = jax.random.PRNGKey(0)
    k_x, k_w, k_fw, k_fb = jax.random.split(key, 4)

    # Example NCHW input (B, C, H, W) = (2, 4, 16, 16)
    x = jax.random.normal(k_x, (2, 4, 16, 16), dtype=jnp.float32)

    # Circuit weights: TorchLayer default init is uniform in [0, 2*pi)
    weights = jax.random.uniform(k_w, (N_LAYERS, N_QUBITS, 3),
                                 minval=0.0, maxval=2.0 * np.pi, dtype=jnp.float32)
    u = build_entangling_unitary(np.asarray(weights, dtype=np.float64))
    u_real_T_np = np.ascontiguousarray(u.T.real).astype(np.float32)   # (16, 16) for the ref
    u_imag_T_np = np.ascontiguousarray(u.T.imag).astype(np.float32)   # (16, 16) for the ref
    # Kernel operates on column vectors: stack [Re(U); Im(U)]  -> (32, 16).
    u_cat2 = jnp.asarray(np.concatenate([u.real, u.imag], axis=0).astype(np.float32))

    # Bit tables (wire 0 = MSB) and Pauli-Z sign table (for the reference + fold).
    bits_np = np.zeros((N_QUBITS, DIM), dtype=np.float32)
    for i in range(N_QUBITS):
        for s in range(DIM):
            bits_np[i, s] = (s >> (N_QUBITS - 1 - i)) & 1
    bits_t = jnp.asarray(bits_np)                            # (n_qubits, 16)
    zsign_np = (1.0 - 2.0 * bits_np.T).astype(np.float32)    # (16, n_qubits)

    # Linear head, PyTorch-style uniform(-1/sqrt(fan_in), 1/sqrt(fan_in)) init.
    bound = 1.0 / np.sqrt(N_QUBITS)
    fc_w = jax.random.uniform(k_fw, (N_CLASSES, N_QUBITS),
                              minval=-bound, maxval=bound, dtype=jnp.float32)
    fc_b = jax.random.uniform(k_fb, (N_CLASSES,),
                              minval=-bound, maxval=bound, dtype=jnp.float32)
    fc_w_t_np = np.asarray(fc_w).T.astype(np.float32)        # (n_qubits, n_classes)
    fc_b_np = np.asarray(fc_b).astype(np.float32)            # (n_classes,)

    # Fold Z-expectation + bias into the head (sum(probs) == 1), then transpose for the
    # batch-on-lanes kernel and zero-pad the class axis 10 -> 16 sublanes:
    #   logits_T = W_fold2 @ probs_T,  W_fold2[:10] = (zsign @ W^T + 1*b)^T
    w_fold = zsign_np @ fc_w_t_np + fc_b_np[None, :]          # (16, 10)
    w_fold2_np = np.zeros((DIM, DIM), dtype=np.float32)
    w_fold2_np[:N_CLASSES, :] = w_fold.T                      # (10, 16) into (16, 16)
    w_fold2 = jnp.asarray(w_fold2_np)

    logits = vqc_forward(x, u_cat2, w_fold2)
    logits = jax.block_until_ready(logits)

    ref = vqc_reference(x, jnp.asarray(u_real_T_np), jnp.asarray(u_imag_T_np),
                        bits_t, jnp.asarray(zsign_np), jnp.asarray(fc_w_t_np),
                        jnp.asarray(fc_b_np).reshape(1, N_CLASSES))
    np.testing.assert_allclose(np.asarray(logits), np.asarray(ref), rtol=1e-5, atol=1e-5)

    print("KERNEL_OK")
</pallas_src>

<mosaic_0001>
module attributes {stable_mosaic.version = 11 : i64} {
  func.func @vqc_kernel(%arg0: i32, %arg1: memref<4x128xf32, #tpu.memory_space<vmem>>, %arg2: memref<32x16xf32, #tpu.memory_space<vmem>>, %arg3: memref<16x16xf32, #tpu.memory_space<vmem>>, %arg4: memref<16x128xf32, #tpu.memory_space<vmem>>) attributes {dimension_semantics = [#tpu.dimension_semantics<parallel>], iteration_bounds = array<i64: 1>, scalar_prefetch = 0 : i64, scratch_operands = 0 : i64, tpu.core_type = #tpu.core_type<tc>, window_params = [{transform_indices = @transform_0, window_bounds = array<i64: 4, 128>}, {pipeline_mode = #tpu.pipeline_mode<synchronous>, transform_indices = @transform_1, window_bounds = array<i64: 32, 16>}, {pipeline_mode = #tpu.pipeline_mode<synchronous>, transform_indices = @transform_2, window_bounds = array<i64: 16, 16>}, {transform_indices = @transform_3, window_bounds = array<i64: 16, 128>}]} {
    %c0 = arith.constant 0 : index
    %c0_0 = arith.constant 0 : index
    %0 = vector.load %arg1[%c0, %c0_0] : memref<4x128xf32, #tpu.memory_space<vmem>>, vector<4x128xf32>
    %cst = arith.constant 5.000000e-01 : f32
    %1 = vector.broadcast %cst : f32 to vector<4x128xf32>
    %2 = arith.mulf %0, %1 : vector<4x128xf32>
    %3 = math.cos %2 : vector<4x128xf32>
    %cst_1 = arith.constant 5.000000e-01 : f32
    %4 = vector.broadcast %cst_1 : f32 to vector<4x128xf32>
    %5 = arith.mulf %0, %4 : vector<4x128xf32>
    %6 = math.sin %5 : vector<4x128xf32>
    %7 = tpu.iota {dimensions = array<i32: 0>} : vector<16x128xi32>
    %cst_2 = arith.constant 1.000000e+00 : f32
    %8 = vector.broadcast %cst_2 : f32 to vector<16x128xf32>
    %c8_i32 = arith.constant 8 : i32
    %9 = vector.broadcast %c8_i32 : i32 to vector<16x128xi32>
    %10 = arith.andi %7, %9 : vector<16x128xi32>
    %c0_i32 = arith.constant 0 : i32
    %11 = vector.broadcast %c0_i32 : i32 to vector<16x128xi32>
    %12 = arith.cmpi ne, %10, %11 : vector<16x128xi32>
    %13 = vector.extract_strided_slice %6 {offsets = [0, 0], sizes = [1, 128], strides = [1, 1]} : vector<4x128xf32> to vector<1x128xf32>
    %14 = vector.extract_strided_slice %3 {offsets = [0, 0], sizes = [1, 128], strides = [1, 1]} : vector<4x128xf32> to vector<1x128xf32>
    %15 = vector.shape_cast %13 : vector<1x128xf32> to vector<1x128xf32>
    %16 = vector.broadcast %15 : vector<1x128xf32> to vector<16x128xf32>
    %17 = vector.shape_cast %14 : vector<1x128xf32> to vector<1x128xf32>
    %18 = vector.broadcast %17 : vector<1x128xf32> to vector<16x128xf32>
    %19 = arith.select %12, %16, %18 : vector<16x128xi1>, vector<16x128xf32>
    %20 = arith.mulf %8, %19 : vector<16x128xf32>
    %c4_i32 = arith.constant 4 : i32
    %21 = vector.broadcast %c4_i32 : i32 to vector<16x128xi32>
    %22 = arith.andi %7, %21 : vector<16x128xi32>
    %c0_i32_3 = arith.constant 0 : i32
    %23 = vector.broadcast %c0_i32_3 : i32 to vector<16x128xi32>
    %24 = arith.cmpi ne, %22, %23 : vector<16x128xi32>
    %25 = vector.extract_strided_slice %6 {offsets = [1, 0], sizes = [1, 128], strides = [1, 1]} : vector<4x128xf32> to vector<1x128xf32>
    %26 = vector.extract_strided_slice %3 {offsets = [1, 0], sizes = [1, 128], strides = [1, 1]} : vector<4x128xf32> to vector<1x128xf32>
    %27 = vector.shape_cast %25 : vector<1x128xf32> to vector<1x128xf32>
    %28 = vector.broadcast %27 : vector<1x128xf32> to vector<16x128xf32>
    %29 = vector.shape_cast %26 : vector<1x128xf32> to vector<1x128xf32>
    %30 = vector.broadcast %29 : vector<1x128xf32> to vector<16x128xf32>
    %31 = arith.select %24, %28, %30 : vector<16x128xi1>, vector<16x128xf32>
    %32 = arith.mulf %20, %31 : vector<16x128xf32>
    %c2_i32 = arith.constant 2 : i32
    %33 = vector.broadcast %c2_i32 : i32 to vector<16x128xi32>
    %34 = arith.andi %7, %33 : vector<16x128xi32>
    %c0_i32_4 = arith.constant 0 : i32
    %35 = vector.broadcast %c0_i32_4 : i32 to vector<16x128xi32>
    %36 = arith.cmpi ne, %34, %35 : vector<16x128xi32>
    %37 = vector.extract_strided_slice %6 {offsets = [2, 0], sizes = [1, 128], strides = [1, 1]} : vector<4x128xf32> to vector<1x128xf32>
    %38 = vector.extract_strided_slice %3 {offsets = [2, 0], sizes = [1, 128], strides = [1, 1]} : vector<4x128xf32> to vector<1x128xf32>
    %39 = vector.shape_cast %37 : vector<1x128xf32> to vector<1x128xf32>
    %40 = vector.broadcast %39 : vector<1x128xf32> to vector<16x128xf32>
    %41 = vector.shape_cast %38 : vector<1x128xf32> to vector<1x128xf32>
    %42 = vector.broadcast %41 : vector<1x128xf32> to vector<16x128xf32>
    %43 = arith.select %36, %40, %42 : vector<16x128xi1>, vector<16x128xf32>
    %44 = arith.mulf %32, %43 : vector<16x128xf32>
    %c1_i32 = arith.constant 1 : i32
    %45 = vector.broadcast %c1_i32 : i32 to vector<16x128xi32>
    %46 = arith.andi %7, %45 : vector<16x128xi32>
    %c0_i32_5 = arith.constant 0 : i32
    %47 = vector.broadcast %c0_i32_5 : i32 to vector<16x128xi32>
    %48 = arith.cmpi ne, %46, %47 : vector<16x128xi32>
    %49 = vector.extract_strided_slice %6 {offsets = [3, 0], sizes = [1, 128], strides = [1, 1]} : vector<4x128xf32> to vector<1x128xf32>
    %50 = vector.extract_strided_slice %3 {offsets = [3, 0], sizes = [1, 128], strides = [1, 1]} : vector<4x128xf32> to vector<1x128xf32>
    %51 = vector.shape_cast %49 : vector<1x128xf32> to vector<1x128xf32>
    %52 = vector.broadcast %51 : vector<1x128xf32> to vector<16x128xf32>
    %53 = vector.shape_cast %50 : vector<1x128xf32> to vector<1x128xf32>
    %54 = vector.broadcast %53 : vector<1x128xf32> to vector<16x128xf32>
    %55 = arith.select %48, %52, %54 : vector<16x128xi1>, vector<16x128xf32>
    %56 = arith.mulf %44, %55 : vector<16x128xf32>
    %c0_6 = arith.constant 0 : index
    %c0_7 = arith.constant 0 : index
    %57 = vector.load %arg2[%c0_6, %c0_7] : memref<32x16xf32, #tpu.memory_space<vmem>>, vector<32x16xf32>
    %cst_8 = arith.constant dense<0.000000e+00> : vector<32x128xf32>
    %58 = tpu.matmul %57, %56, %cst_8 {dimension_numbers = #tpu.dot_dimension_numbers<[1], [0], [0], [1], [0, 0, 1, 1], [], []>} : vector<32x16xf32>, vector<16x128xf32>, vector<32x128xf32> -> vector<32x128xf32>
    %59 = vector.extract_strided_slice %58 {offsets = [0, 0], sizes = [16, 128], strides = [1, 1]} : vector<32x128xf32> to vector<16x128xf32>
    %60 = arith.mulf %59, %59 : vector<16x128xf32>
    %61 = vector.extract_strided_slice %58 {offsets = [16, 0], sizes = [16, 128], strides = [1, 1]} : vector<32x128xf32> to vector<16x128xf32>
    %62 = arith.mulf %61, %61 : vector<16x128xf32>
    %63 = arith.addf %60, %62 : vector<16x128xf32>
    %c0_9 = arith.constant 0 : index
    %c0_10 = arith.constant 0 : index
    %64 = vector.load %arg3[%c0_9, %c0_10] : memref<16x16xf32, #tpu.memory_space<vmem>>, vector<16x16xf32>
    %cst_11 = arith.constant dense<0.000000e+00> : vector<16x128xf32>
    %65 = tpu.matmul %64, %63, %cst_11 {dimension_numbers = #tpu.dot_dimension_numbers<[1], [0], [0], [1], [0, 0, 1, 1], [], []>} : vector<16x16xf32>, vector<16x128xf32>, vector<16x128xf32> -> vector<16x128xf32>
    %c0_12 = arith.constant 0 : index
    %c0_13 = arith.constant 0 : index
    %66 = vector.load %arg4[%c0_12, %c0_13] : memref<16x128xf32, #tpu.memory_space<vmem>>, vector<16x128xf32>
    tpu.vector_store %arg4[%c0_12, %c0_13], %65 {strides = array<i32>} : memref<16x128xf32, #tpu.memory_space<vmem>>, vector<16x128xf32>,
    return
  }
  func.func @transform_0(%arg0: i32) -> (i32, i32) {
    %c0_i32 = arith.constant 0 : i32
    %c0_i32_0 = arith.constant 0 : i32
    return %c0_i32, %arg0 : i32, i32
  }
  func.func @transform_1(%arg0: i32) -> (i32, i32) {
    %c0_i32 = arith.constant 0 : i32
    %c0_i32_0 = arith.constant 0 : i32
    %c0_i32_1 = arith.constant 0 : i32
    return %c0_i32, %c0_i32_0 : i32, i32
  }
  func.func @transform_2(%arg0: i32) -> (i32, i32) {
    %c0_i32 = arith.constant 0 : i32
    %c0_i32_0 = arith.constant 0 : i32
    %c0_i32_1 = arith.constant 0 : i32
    return %c0_i32, %c0_i32_0 : i32, i32
  }
  func.func @transform_3(%arg0: i32) -> (i32, i32) {
    %c0_i32 = arith.constant 0 : i32
    %c0_i32_0 = arith.constant 0 : i32
    return %c0_i32, %arg0 : i32, i32
  }
}

</mosaic_0001>

<llo_original>
// kernel: tpu_custom_call.1
$region0: #{tpu_custom_call.1}
  #allocation0 [shape = 'u32[]', space=smem, size = 0x4, offset = 0x4, fixed_abs, tag = 'smem constant byte address 0x4 - core index']
  #allocation1 [shape = 'u32[72,128]{1,0:T(1,128)}', space=vmem, size = 0x9000, scoped, tag = 'internal scratch']
  %s0 = inlined_call_operand.vmem [shape: f32[4,128], index: 0, kind: input, shape index: {}]
  %s1 = inlined_call_operand.vmem [shape: f32[32,16], index: 1, kind: input, shape index: {}]
  %s2 = inlined_call_operand.vmem [shape: f32[16,16], index: 2, kind: input, shape index: {}]
  %s3 = inlined_call_operand.hbm [shape: f32[16,128], index: 3, kind: output, shape index: {}]
  %s4 = sld [smem:[#allocation0]]
  $region22: #{tpu_custom_call.1} parent=0
    _
  %s6 = ssub.s32 1, %s4
  %s7 = scalar_select 0, %s6, %s4
  $region1: #{tpu_custom_call.1} parent=0
    #allocation2 [shape = 'u8[8192]{0}', space=vmem, size = 0x2000, scoped, tag = 'output window, operand 0, single buffered']
    #allocation3 [shape = 's32[1]{0}', space=sflag, size = 0x4, scoped, tag = 'scoped memory for tpu_custom_call.1']
    %8 = vsyncpa [#allocation3], 0
    // Predicated region
    $region2: #{tpu_custom_call.1} parent=1 // pred_check
      _
    $region3: #{tpu_custom_call.1} parent=1 // pred_check_branch
      %10 = sbr.rel (0) target = $region5
    $region4: #{tpu_custom_call.1} parent=1 // pred_region
      _
    $region5: #{tpu_custom_call.1} parent=1 // pred_fallthru
      _
    // Predicated region
    $region6: #{tpu_custom_call.1} parent=1 // pred_check
      _
    $region7: #{tpu_custom_call.1} parent=1 // pred_check_branch
      %12 = sbr.rel (0) target = $region9
    $region8: #{tpu_custom_call.1} parent=1 // pred_region
      _
    $region9: #{tpu_custom_call.1} parent=1 // pred_fallthru
      _
    // Predicated region
    $region10: #{tpu_custom_call.1} parent=1 // pred_check
      _
    $region11: #{tpu_custom_call.1} parent=1 // pred_check_branch
      %14 = sbr.rel (0) target = $region13
    $region12: #{tpu_custom_call.1} parent=1 // pred_region
      _
    $region13: #{tpu_custom_call.1} parent=1 // pred_fallthru
      _
    %v15 = vld [vmem:[%s0] sm:$0xf]
    %v16 = vmul.f32 %v15, 0.5
    %v17 = vand.u32 2147483647, %v16
    %vm18 = vcmp.le.f32.partialorder %v17, 0.7853982
    %vm19 = vcmp.lt.s32.totalorder %v16, 0
    %v20 = vand.u32 %v16, 2139095040
    %v21 = vshrl.u32 %v20, 23
    %v22 = vsub.s32 %v21, 127
    %v23 = vand.u32 2147483647, %v16
    %v24 = vand.u32 %v23, 8388607
    %v25 = vor.u32 %v24, 8388608
    %v26 = vsub.s32 0, %v25
    %v27 = vadd.s32 %v22, 1
    %vm28 = vcmp.gt.s32.totalorder %v27, 0
    %v29 = vsel %vm28, %v27, 0
    %v30 = vshrl.u32 %v29, 5
    %v31 = vand.u32 %v29, 31
    %v32 = vsub.s32 32, %v31
    %v33 = vshrl.u32 683565275, %v32
    %v34 = vshll.u32 683565275, %v31
    %v35 = vshrl.u32 2475754826, %v32
    %v36 = vor.u32 %v34, %v35
    %v37 = vshll.u32 2475754826, %v31
    %v38 = vshrl.u32 2131351028, %v32
    %v39 = vor.u32 %v37, %v38
    %v40 = vshll.u32 2131351028, %v31
    %v41 = vshrl.u32 2102212464, %v32
    %v42 = vor.u32 %v40, %v41
    %v43 = vshll.u32 2102212464, %v31
    %v44 = vshrl.u32 920167782, %v32
    %v45 = vor.u32 %v43, %v44
    %v46 = vshll.u32 920167782, %v31
    %v47 = vshrl.u32 1326507024, %v32
    %v48 = vor.u32 %v46, %v47
    %vm49 = vcmp.lt.s32.totalorder %v30, 1
    %vm50 = vcmp.lt.s32.totalorder %v30, 2
    %vm51 = vcmp.lt.s32.totalorder %v30, 3
    %vm52 = vcmp.lt.s32.totalorder %v30, 4
    %v53 = vsel %vm49, %v33, %v36
    %v54 = vsel %vm52, %v42, 2102212464
    %v55 = vsel %vm51, %v39, %v54
    %v56 = vsel %vm50, %v53, %v55
    %v57 = vsel %vm49, %v36, %v39
    %v58 = vsel %vm52, %v45, 920167782
    %v59 = vsel %vm51, %v42, %v58
    %v60 = vsel %vm50, %v57, %v59
    %v61 = vsel %vm49, %v39, %v42
    %v62 = vsel %vm52, %v48, 1326507024
    %v63 = vsel %vm51, %v45, %v62
    %v64 = vsel %vm50, %v61, %v63
    %v65 = vshll.u32 %v25, 8
    %v66 = vand.u32 %v65, 65535
    %v67 = vshrl.u32 %v65, 16
    %v68 = vand.u32 %v64, 65535
    %v69 = vshrl.u32 %v64, 16
    %v70 = vmul.u32 %v66, %v68
    %v71 = vmul.u32 %v66, %v69
    %v72 = vmul.u32 %v67, %v68
    %v73 = vmul.u32 %v67, %v69
    %v74 = vshll.u32 %v71, 16
    %v75 = vshrl.u32 %v71, 16
    %v76 = vshll.u32 %v72, 16
    %v77 = vshrl.u32 %v72, 16
    %vm78 = vc.u32 %v70, %v74
    %v79 = vsel %vm78, 1, 0
    %v80 = vadd.s32 %v70, %v74
    %v81 = vadd.s32 %v73, %v79
    %vm82 = vc.u32 %v80, %v76
    %v83 = vsel %vm82, 1, 0
    %v84 = vadd.s32 %v80, %v76
    %v85 = vadd.s32 %v81, %v83
    %v86 = vadd.s32 %v85, %v75
    %v87 = vadd.s32 %v86, %v77
    %v88 = vand.u32 %v65, 65535
    %v89 = vshrl.u32 %v65, 16
    %v90 = vand.u32 %v60, 65535
    %v91 = vshrl.u32 %v60, 16
    %v92 = vmul.u32 %v88, %v90
    %v93 = vmul.u32 %v88, %v91
    %v94 = vmul.u32 %v89, %v90
    %v95 = vmul.u32 %v89, %v91
    %v96 = vshll.u32 %v93, 16
    %v97 = vshrl.u32 %v93, 16
    %v98 = vshll.u32 %v94, 16
    %v99 = vshrl.u32 %v94, 16
    %vm100 = vc.u32 %v92, %v96
    %v101 = vsel %vm100, 1, 0
    %v102 = vadd.s32 %v92, %v96
    %v103 = vadd.s32 %v95, %v101
    %vm104 = vc.u32 %v102, %v98
    %v105 = vsel %vm104, 1, 0
    %v106 = vadd.s32 %v102, %v98
    %v107 = vadd.s32 %v103, %v105
    %v108 = vadd.s32 %v107, %v97
    %v109 = vadd.s32 %v108, %v99
    %v110 = vmul.u32 %v65, %v56
    %v111 = vadd.s32 %v87, %v106
    %vm112 = vc.u32 %v87, %v106
    %v113 = vadd.s32 %v109, 1
    %v114 = vsel %vm112, %v113, %v109
    %v115 = vadd.s32 %v110, %v114
    %v116 = vadd.s32 %v115, 536870912
    %v117 = vshrl.u32 %v116, 30
    %v118 = vshll.u32 %v117, 30
    %v119 = vsub.s32 %v115, %v118
    %vm120 = vcmp.lt.s32.totalorder %v119, 0
    %v121 = vsub.s32 0, %v119
    %v122 = vsel %vm120, %v121, %v119
    %v123 = vclz %v122
    %v124 = vsub.s32 %v123, 2
    %vm125 = vcmp.gt.s32.totalorder 0, %v124
    %v126 = vsel %vm125, 0, %v124
    %v127 = vsub.s32 32, %v126
    %v128 = vshll.u32 %v119, %v126
    %v129 = vshrl.u32 %v111, %v127
    %v130 = vor.u32 %v128, %v129
    %v131 = vsub.s32 4294967266, %v126
    %v132 = vadd.s32 %v131, 127
    %v133 = vshll.u32 %v132, 23
    %v134 = vor.u32 4788187, %v133
    %v135 = vand.u32 2147483647, %v134
    %v137 = vcvt.s32.f32 %v130
    %v138 = vmul.f32 %v137, %v135
    %v139 = vxor.u32 %v138, 2147483648
    %v140 = vsel %vm19, %v139, %v138
    %v141 = vsub.s32 4, %v117
    %v142 = vsel %vm19, %v141, %v117
    %v143 = vsel %vm18, %v16, %v140
    %v144 = vsel %vm18, 0, %v142
    %v145 = vmul.f32 %v143, %v143
    %v146 = vmul.f32 %v145, -0.001358992
    %v147 = vadd.f32 %v146, 0.041655596
    %v148 = vmul.f32 %v145, %v147
    %v149 = vadd.f32 %v148, -0.4999988
    %v150 = vmul.f32 %v145, %v149
    %v151 = vadd.f32 1.0, %v150
    %v152 = vmul.f32 %v143, %v143
    %v153 = vmul.f32 %v152, -0.00019511016
    %v154 = vadd.f32 %v153, 0.008332121
    %v155 = vmul.f32 %v152, %v154
    %v156 = vadd.f32 %v155, -0.16666654
    %v157 = vmul.f32 %v152, %v156
    %v158 = vadd.f32 %v157, 1.0
    %v159 = vmul.f32 %v158, %v143
    %vm160 = vweird.f32 %v16
    %v161 = vand.u32 %v144, 3
    %vm162 = vcmp.lt.s32.totalorder %v161, 2
    %vm163 = vcmp.eq.s32.totalorder %v161, 0
    %v164 = vxor.u32 %v159, 2147483648
    %v165 = vsel %vm163, %v151, %v164
    %vm166 = vcmp.eq.s32.totalorder %v161, 2
    %v167 = vxor.u32 %v151, 2147483648
    %v168 = vsel %vm166, %v167, %v159
    %v169 = vsel %vm162, %v165, %v168
    %v170 = vsel %vm160, nan, %v169
    %v171 = vand.u32 2147483647, %v16
    %vm172 = vcmp.le.f32.partialorder %v171, 0.7853982
    %vm173 = vcmp.lt.s32.totalorder %v16, 0
    %v174 = vand.u32 %v16, 2139095040
    %v175 = vshrl.u32 %v174, 23
    %v176 = vsub.s32 %v175, 127
    %v177 = vand.u32 2147483647, %v16
    %v178 = vand.u32 %v177, 8388607
    %v179 = vor.u32 %v178, 8388608
    %v180 = vsub.s32 0, %v179
    %v181 = vadd.s32 %v176, 1
    %vm182 = vcmp.gt.s32.totalorder %v181, 0
    %v183 = vsel %vm182, %v181, 0
    %v184 = vshrl.u32 %v183, 5
    %v185 = vand.u32 %v183, 31
    %v186 = vsub.s32 32, %v185
    %v187 = vshrl.u32 683565275, %v186
    %v188 = vshll.u32 683565275, %v185
    %v189 = vshrl.u32 2475754826, %v186
    %v190 = vor.u32 %v188, %v189
    %v191 = vshll.u32 2475754826, %v185
    %v192 = vshrl.u32 2131351028, %v186
    %v193 = vor.u32 %v191, %v192
    %v194 = vshll.u32 2131351028, %v185
    %v195 = vshrl.u32 2102212464, %v186
    %v196 = vor.u32 %v194, %v195
    %v197 = vshll.u32 2102212464, %v185
    %v198 = vshrl.u32 920167782, %v186
    %v199 = vor.u32 %v197, %v198
    %v200 = vshll.u32 920167782, %v185
    %v201 = vshrl.u32 1326507024, %v186
    %v202 = vor.u32 %v200, %v201
    %vm203 = vcmp.lt.s32.totalorder %v184, 1
    %vm204 = vcmp.lt.s32.totalorder %v184, 2
    %vm205 = vcmp.lt.s32.totalorder %v184, 3
    %vm206 = vcmp.lt.s32.totalorder %v184, 4
    %v207 = vsel %vm203, %v187, %v190
    %v208 = vsel %vm206, %v196, 2102212464
    %v209 = vsel %vm205, %v193, %v208
    %v210 = vsel %vm204, %v207, %v209
    %v211 = vsel %vm203, %v190, %v193
    %v212 = vsel %vm206, %v199, 920167782
    %v213 = vsel %vm205, %v196, %v212
    %v214 = vsel %vm204, %v211, %v213
    %v215 = vsel %vm203, %v193, %v196
    %v216 = vsel %vm206, %v202, 1326507024
    %v217 = vsel %vm205, %v199, %v216
    %v218 = vsel %vm204, %v215, %v217
    %v219 = vshll.u32 %v179, 8
    %v220 = vand.u32 %v219, 65535
    %v221 = vshrl.u32 %v219, 16
    %v222 = vand.u32 %v218, 65535
    %v223 = vshrl.u32 %v218, 16
    %v224 = vmul.u32 %v220, %v222
    %v225 = vmul.u32 %v220, %v223
    %v226 = vmul.u32 %v221, %v222
    %v227 = vmul.u32 %v221, %v223
    %v228 = vshll.u32 %v225, 16
    %v229 = vshrl.u32 %v225, 16
    %v230 = vshll.u32 %v226, 16
    %v231 = vshrl.u32 %v226, 16
    %vm232 = vc.u32 %v224, %v228
    %v233 = vsel %vm232, 1, 0
    %v234 = vadd.s32 %v224, %v228
    %v235 = vadd.s32 %v227, %v233
    %vm236 = vc.u32 %v234, %v230
    %v237 = vsel %vm236, 1, 0
    %v238 = vadd.s32 %v234, %v230
    %v239 = vadd.s32 %v235, %v237
    %v240 = vadd.s32 %v239, %v229
    %v241 = vadd.s32 %v240, %v231
    %v242 = vand.u32 %v219, 65535
    %v243 = vshrl.u32 %v219, 16
    %v244 = vand.u32 %v214, 65535
    %v245 = vshrl.u32 %v214, 16
    %v246 = vmul.u32 %v242, %v244
    %v247 = vmul.u32 %v242, %v245
    %v248 = vmul.u32 %v243, %v244
    %v249 = vmul.u32 %v243, %v245
    %v250 = vshll.u32 %v247, 16
    %v251 = vshrl.u32 %v247, 16
    %v252 = vshll.u32 %v248, 16
    %v253 = vshrl.u32 %v248, 16
    %vm254 = vc.u32 %v246, %v250
    %v255 = vsel %vm254, 1, 0
    %v256 = vadd.s32 %v246, %v250
    %v257 = vadd.s32 %v249, %v255
    %vm258 = vc.u32 %v256, %v252
    %v259 = vsel %vm258, 1, 0
    %v260 = vadd.s32 %v256, %v252
    %v261 = vadd.s32 %v257, %v259
    %v262 = vadd.s32 %v261, %v251
    %v263 = vadd.s32 %v262, %v253
    %v264 = vmul.u32 %v219, %v210
    %v265 = vadd.s32 %v241, %v260
    %vm266 = vc.u32 %v241, %v260
    %v267 = vadd.s32 %v263, 1
    %v268 = vsel %vm266, %v267, %v263
    %v269 = vadd.s32 %v264, %v268
    %v270 = vadd.s32 %v269, 536870912
    %v271 = vshrl.u32 %v270, 30
    %v272 = vshll.u32 %v271, 30
    %v273 = vsub.s32 %v269, %v272
    %vm274 = vcmp.lt.s32.totalorder %v273, 0
    %v275 = vsub.s32 0, %v273
    %v276 = vsel %vm274, %v275, %v273
    %v277 = vclz %v276
    %v278 = vsub.s32 %v277, 2
    %vm279 = vcmp.gt.s32.totalorder 0, %v278
    %v280 = vsel %vm279, 0, %v278
    %v281 = vsub.s32 32, %v280
    %v282 = vshll.u32 %v273, %v280
    %v283 = vshrl.u32 %v265, %v281
    %v284 = vor.u32 %v282, %v283
    %v285 = vsub.s32 4294967266, %v280
    %v286 = vadd.s32 %v285, 127
    %v287 = vshll.u32 %v286, 23
    %v288 = vor.u32 4788187, %v287
    %v289 = vand.u32 2147483647, %v288
    %v291 = vcvt.s32.f32 %v284
    %v292 = vmul.f32 %v291, %v289
    %v293 = vxor.u32 %v292, 2147483648
    %v294 = vsel %vm173, %v293, %v292
    %v295 = vsub.s32 4, %v271
    %v296 = vsel %vm173, %v295, %v271
    %v297 = vsel %vm172, %v16, %v294
    %v298 = vsel %vm172, 0, %v296
    %v299 = vmul.f32 %v297, %v297
    %v300 = vmul.f32 %v299, -0.001358992
    %v301 = vadd.f32 %v300, 0.041655596
    %v302 = vmul.f32 %v299, %v301
    %v303 = vadd.f32 %v302, -0.4999988
    %v304 = vmul.f32 %v299, %v303
    %v305 = vadd.f32 1.0, %v304
    %v306 = vmul.f32 %v297, %v297
    %v307 = vmul.f32 %v306, -0.00019511016
    %v308 = vadd.f32 %v307, 0.008332121
    %v309 = vmul.f32 %v306, %v308
    %v310 = vadd.f32 %v309, -0.16666654
    %v311 = vmul.f32 %v306, %v310
    %v312 = vadd.f32 %v311, 1.0
    %v313 = vmul.f32 %v312, %v297
    %vm314 = vweird.f32 %v16
    %v315 = vadd.s32 %v298, 3
    %v316 = vand.u32 %v315, 3
    %vm317 = vcmp.lt.s32.totalorder %v316, 2
    %vm318 = vcmp.eq.s32.totalorder %v316, 0
    %v319 = vxor.u32 %v313, 2147483648
    %v320 = vsel %vm318, %v305, %v319
    %vm321 = vcmp.eq.s32.totalorder %v316, 2
    %v322 = vxor.u32 %v305, 2147483648
    %v323 = vsel %vm321, %v322, %v313
    %v324 = vsel %vm317, %v320, %v323
    %v325 = vsel %vm314, nan, %v324
    %v326 = vlaneseq
    %v327 = vshrl.u32 %v326, 7
    %v328 = vadd.s32 %v327, 8
    %v329 = vand.u32 %v327, 8
    %v330 = vand.u32 %v328, 8
    %vm331 = vcmp.ne.s32.totalorder %v329, 0
    %vm332 = vcmp.ne.s32.totalorder %v330, 0
    %v333 = vperm.slane %v325, 0
    %v334 = vperm.slane %v170, 0
    %v335 = vsel %vm331, %v333, %v334
    %v336 = vsel %vm332, %v333, %v334
    %v337 = vand.u32 %v327, 4
    %v338 = vand.u32 %v328, 4
    %vm339 = vcmp.ne.s32.totalorder %v337, 0
    %vm340 = vcmp.ne.s32.totalorder %v338, 0
    %v341 = vperm.slane %v325, 1
    %v342 = vperm.slane %v170, 1
    %v343 = vsel %vm339, %v341, %v342
    %v344 = vsel %vm340, %v341, %v342
    %v345 = vmul.f32 %v335, %v343
    %v346 = vmul.f32 %v336, %v344
    %v347 = vand.u32 %v327, 2
    %v348 = vand.u32 %v328, 2
    %vm349 = vcmp.ne.s32.totalorder %v347, 0
    %vm350 = vcmp.ne.s32.totalorder %v348, 0
    %v351 = vperm.slane %v325, 2
    %v352 = vperm.slane %v170, 2
    %v353 = vsel %vm349, %v351, %v352
    %v354 = vsel %vm350, %v351, %v352
    %v355 = vmul.f32 %v345, %v353
    %v356 = vmul.f32 %v346, %v354
    %v357 = vand.u32 %v327, 1
    %v358 = vand.u32 %v328, 1
    %vm359 = vcmp.ne.s32.totalorder %v357, 0
    %vm360 = vcmp.ne.s32.totalorder %v358, 0
    %v361 = vperm.slane %v325, 3
    %v362 = vperm.slane %v170, 3
    %v363 = vsel %vm359, %v361, %v362
    %v364 = vsel %vm360, %v361, %v362
    %v365 = vmul.f32 %v355, %v363
    %v366 = vmul.f32 %v356, %v364
    %v367 = vld [vmem:[%s1] sm:$0xff]
    %v368 = vld [vmem:[%s1 + $0x8] sm:$0xff]
    %v369 = vld [vmem:[%s1 + $0x10] sm:$0xff]
    %v370 = vld [vmem:[%s1 + $0x18] sm:$0xff]
    %vm371 = vcmask 130048
    %v373 = vsel %vm371, %v367, 0
    %v376 = vsel %vm371, %v368, 0
    %v379 = vsel %vm371, %v369, 0
    %v382 = vsel %vm371, %v370, 0
    %384 = vmatpush.msra.mxu0 0.0
    %385 = vmatpush.msra.mxu0 0.0
    %386 = vmatpush.msra.mxu0 0.0
    %387 = vmatpush.msra.mxu0 0.0
    %388 = vmatpush.msra.mxu0 0.0
    %389 = vmatpush.msra.mxu0 0.0
    %390 = vmatpush.msra.mxu0 0.0
    %391 = vmatpush.msra.mxu0 0.0
    %392 = vmatpush.msra.mxu0 0.0
    %393 = vmatpush.msra.mxu0 0.0
    %394 = vmatpush.msra.mxu0 0.0
    %395 = vmatpush.msra.mxu0 0.0
    %396 = vmatpush.msra.mxu0 0.0
    %397 = vmatpush.msra.mxu0 0.0
    %398 = vmatpush.msra.mxu0 %v366
    %399 = vmatpush.msra.mxu0 %v365
    %400 = vmatmul.f32.gmra.mxu0 %v373
    %v401 = vpop.f32.mrf.mxu0
    %v402 = vadd.f32 0.0, %v401
    %403 = vmatmul.f32.gmra.mxu0 %v376
    %v404 = vpop.f32.mrf.mxu0
    %v405 = vadd.f32 0.0, %v404
    %406 = vmatmul.f32.gmra.mxu0 %v379
    %v407 = vpop.f32.mrf.mxu0
    %v408 = vadd.f32 0.0, %v407
    %409 = vmatmul.f32.gmra.mxu0 %v382
    %v410 = vpop.f32.mrf.mxu0
    %v411 = vadd.f32 0.0, %v410
    %412 = vdwg.mxu0
    %v413 = vmul.f32 %v402, %v402
    %v414 = vmul.f32 %v405, %v405
    %v415 = vmul.f32 %v408, %v408
    %v416 = vmul.f32 %v411, %v411
    %v417 = vadd.f32 %v413, %v415
    %v418 = vadd.f32 %v414, %v416
    %v419 = vld [vmem:[%s2] sm:$0xff]
    %v420 = vld [vmem:[%s2 + $0x8] sm:$0xff]
    %v422 = vsel %vm371, %v419, 0
    %v425 = vsel %vm371, %v420, 0
    %427 = vmatpush.msra.mxu0 0.0
    %428 = vmatpush.msra.mxu0 0.0
    %429 = vmatpush.msra.mxu0 0.0
    %430 = vmatpush.msra.mxu0 0.0
    %431 = vmatpush.msra.mxu0 0.0
    %432 = vmatpush.msra.mxu0 0.0
    %433 = vmatpush.msra.mxu0 0.0
    %434 = vmatpush.msra.mxu0 0.0
    %435 = vmatpush.msra.mxu0 0.0
    %436 = vmatpush.msra.mxu0 0.0
    %437 = vmatpush.msra.mxu0 0.0
    %438 = vmatpush.msra.mxu0 0.0
    %439 = vmatpush.msra.mxu0 0.0
    %440 = vmatpush.msra.mxu0 0.0
    %441 = vmatpush.msra.mxu0 %v418
    %442 = vmatpush.msra.mxu0 %v417
    %443 = vmatmul.f32.gmra.mxu0 %v422
    %v444 = vpop.f32.mrf.mxu0
    %v445 = vadd.f32 0.0, %v444
    %446 = vmatmul.f32.gmra.mxu0 %v425
    %v447 = vpop.f32.mrf.mxu0
    %v448 = vadd.f32 0.0, %v447
    %449 = vdwg.mxu0
    %450 = vst [vmem:[#allocation2] sm:$0xff] %v445
    %451 = vst [vmem:[#allocation2 + $0x8] sm:$0xff] %v448
    // Predicated region
    $region14: #{tpu_custom_call.1} parent=1 // pred_check
      _
    $region15: #{tpu_custom_call.1} parent=1 // pred_check_branch
      %453 = sbr.rel (0) target = $region17
    $region16: #{tpu_custom_call.1} parent=1 // pred_region
      %455 = vsyncadd [#allocation3], 0
      %s456 = sshll.u32 [#allocation2], 4
      %s457 = int_to_ptr.vmem [resolvable:$true] %s456
      %s458 = sshll.u32 %s3, 4
      %s459 = int_to_ptr.hbm [resolvable:$true] %s458
      %464 = dma.vmem_to_hbm [thread:$0]  %s457, 256, %s459, [#allocation3], 128, 128, 8
    $region17: #{tpu_custom_call.1} parent=1 // pred_fallthru
      _
    // Predicated region
    $region18: #{tpu_custom_call.1} parent=1 // pred_check
      _
    $region19: #{tpu_custom_call.1} parent=1 // pred_check_branch
      %466 = sbr.rel (0) target = $region21
    $region20: #{tpu_custom_call.1} parent=1 // pred_region
      %468 = dma.done [#allocation3], 256
    $region21: #{tpu_custom_call.1} parent=1 // pred_fallthru
      _
    %469 = vsyncpa [#allocation3], 1

</llo_original>
